<compile_context>
chip_gen: v7x
topology: tpu7x:2x2x1
jax: 0.10.0
libtpu: 0.0.40
codegen_flags: <defaults>
</compile_context>

<pallas_src>
import jax
import jax.numpy as jnp
from jax.experimental import pallas as pl
from jax.experimental.pallas import tpu as pltpu


# ---------------------------------------------------------------------------
# Parameter setup (PyTorch __init__ equivalent) — plain JAX, done once.
# ---------------------------------------------------------------------------
def build_position_embedding_table(num_embeddings: int,
                                   embedding_dim: int,
                                   sin_scale_factor: int = 30) -> jnp.ndarray:
    if embedding_dim % 2 != 0:
        raise RuntimeError("embedding_dim must be even")
    pos = jnp.arange(num_embeddings, dtype=jnp.float32)[:, None]          # (N, 1)
    exponent = jnp.arange(0, embedding_dim, 2, dtype=jnp.float32) / embedding_dim
    wavelength = jnp.power(jnp.float32(sin_scale_factor), exponent)       # (D/2,)
    angles = pos / wavelength                                             # (N, D/2)
    body = jnp.stack([jnp.sin(angles), jnp.cos(angles)], axis=-1)
    body = body.reshape(num_embeddings, embedding_dim)
    pad_row = jnp.zeros((1, embedding_dim), dtype=jnp.float32)
    return jnp.concatenate([pad_row, body], axis=0)                       # (N+1, D)


def split_table_to_bf16_terms(table: jnp.ndarray, num_terms: int = 3) -> jnp.ndarray:
    """Split an f32 table into bf16 planes whose sum equals the table.

    3 bf16 planes (8 mantissa bits each) recover all 24 f32 mantissa bits, so
    the split is exact; 1 plane is the bf16-rounded fast path.
    Done once at parameter-setup time (analogous to register_buffer).
    """
    terms = []
    rem = table.astype(jnp.float32)
    for _ in range(num_terms):
        term = rem.astype(jnp.bfloat16)
        terms.append(term)
        rem = rem - term.astype(jnp.float32)
    return jnp.stack(terms, axis=0)                                       # (terms, N+1, D)


# ---------------------------------------------------------------------------
# Pallas kernel
# ---------------------------------------------------------------------------
def _embed_tile_kernel(ids_ref, table_ref, out_ref):
    """Gather one token tile via DEFAULT-precision one-hot matmuls on the MXU.

    ids_ref:   (T, 1)            int32  token indices for this tile (VMEM)
    table_ref: (terms, N+1, D)   bf16   split table, whole array VMEM-resident
    out_ref:   (T, D)            gathered rows (terms summed exactly in f32)
    """
    t = out_ref.shape[0]
    n_terms, n_rows, _ = table_ref.shape

    # In-kernel clamp of out-of-range indices (free VPU slot).
    # NOTE: PyTorch indexing would error on out-of-range indices; we clamp.
    ids = jnp.clip(ids_ref[...], 0, n_rows - 1)                           # (T, 1)
    row_iota = jax.lax.broadcasted_iota(jnp.int32, (t, n_rows), 1)        # (T, N+1)
    one_hot = (ids == row_iota).astype(jnp.bfloat16)                      # exact 0/1 in bf16

    acc = jnp.zeros(out_ref.shape, jnp.float32)
    for k in range(n_terms):  # static unroll: 1 (fast) or 3 (exact) MXU passes
        acc = acc + jnp.dot(one_hot, table_ref[k],
                            preferred_element_type=jnp.float32)
    out_ref[...] = acc.astype(out_ref.dtype)


# ---------------------------------------------------------------------------
# Wrapper
# ---------------------------------------------------------------------------
def _round_up(x: int, m: int) -> int:
    return ((x + m - 1) // m) * m


def _ceil_div(a: int, b: int) -> int:
    return (a + b - 1) // b


def sin_position_embedding_lookup(table_terms: jnp.ndarray,
                                  token_indices: jnp.ndarray,
                                  *,
                                  out_dtype=jnp.float32,
                                  tile_tokens: int = 512) -> jnp.ndarray:
    """Pallas lookup: out[..., :] = sum_k table_terms[k][token_indices[...], :]."""
    orig_shape = token_indices.shape
    n_terms, n_rows, emb_dim = table_terms.shape

    flat_ids = token_indices.reshape(-1).astype(jnp.int32)
    n_tokens = int(flat_ids.shape[0])
    if n_tokens == 0:
        return jnp.zeros((*orig_shape, emb_dim), out_dtype)

    # Token tile: multiple of 8 (sublane), capped at tile_tokens.  Split into
    # >= 2 tiles when possible so the "parallel" grid axis can shard across
    # v7x's two TensorCores (no-op on v5e/v6e).
    t = min(_round_up(tile_tokens, 8), _round_up(n_tokens, 8))
    if n_tokens >= 16 and _ceil_div(n_tokens, t) < 2:
        t = _round_up(_ceil_div(n_tokens, 2), 8)
    n_padded = _round_up(n_tokens, t)
    if n_padded != n_tokens:
        # Pad with index 0 (the all-zeros padding row); dropped again below.
        flat_ids = jnp.concatenate(
            [flat_ids, jnp.zeros((n_padded - n_tokens,), jnp.int32)])
    ids_col = flat_ids.reshape(n_padded, 1)                               # (Np, 1)
    n_tiles = n_padded // t

    # Explicit VMEM budget: single-buffered table + double-buffered ids/output
    # blocks + gather scratch, 2x headroom, capped under v7x's 64 MiB physical.
    lane = 128
    out_itemsize = jnp.dtype(out_dtype).itemsize
    table_bytes = n_terms * _round_up(n_rows, 16) * _round_up(emb_dim, lane) * 2
    ids_bytes = 2 * t * lane * 4
    out_bytes = 2 * t * _round_up(emb_dim, lane) * out_itemsize
    scratch_bytes = t * _round_up(n_rows, lane) * 2 + t * _round_up(emb_dim, lane) * 4
    vmem_limit = int(min(56 * 2**20,
                         max(32 * 2**20,
                             2 * (table_bytes + ids_bytes + out_bytes + scratch_bytes))))

    cost = pl.CostEstimate(
        flops=2 * n_terms * n_padded * n_rows * emb_dim,
        transcendentals=0,
        bytes_accessed=(n_terms * n_rows * emb_dim * 2       # split table (read once)
                        + n_padded * 4                       # indices read
                        + n_padded * emb_dim * out_itemsize  # output write
                        ),
    )

    out = pl.pallas_call(
        _embed_tile_kernel,
        out_shape=jax.ShapeDtypeStruct((n_padded, emb_dim), out_dtype),
        grid_spec=pl.GridSpec(
            grid=(n_tiles,),
            in_specs=[
                # per-tile token indices (pipelined, double-buffered)
                pl.BlockSpec((t, 1), lambda i: (i, 0)),
                # whole split table resident in VMEM for the kernel's lifetime:
                # one HBM read, ONE buffer (not part of the DMA pipeline)
                pl.BlockSpec(memory_space=pltpu.MemorySpace.VMEM),
            ],
            out_specs=pl.BlockSpec((t, emb_dim), lambda i: (i, 0)),
        ),
        compiler_params=pltpu.CompilerParams(
            dimension_semantics=("parallel",),
            vmem_limit_bytes=vmem_limit),
        cost_estimate=cost,
    )(ids_col, table_terms)

    if n_padded != n_tokens:
        out = out[:n_tokens]                                              # drop pad rows
    return out.reshape(*orig_shape, emb_dim)


class SinPositionEmbedding:
    """JAX/Pallas port of the PyTorch SinPositionEmbedding module."""

    def __init__(self, num_embeddings: int, embedding_dim: int,
                 sin_scale_factor: int = 30, *, exact: bool = True,
                 out_dtype=jnp.float32, tile_tokens: int = 512) -> None:
        if embedding_dim % 2 != 0:
            raise RuntimeError("embedding_dim must be even")
        self.position_embedding_matrix = build_position_embedding_table(
            num_embeddings, embedding_dim, sin_scale_factor)
        # exact=True: 3 bf16 planes reproduce the f32 buffer exactly.
        # exact=False: 1 plane -> single MXU pass, bf16-rounded rows.
        self._table_terms = split_table_to_bf16_terms(
            self.position_embedding_matrix, 3 if exact else 1)
        self._out_dtype = out_dtype
        self._tile_tokens = tile_tokens

    def __call__(self, token_indices: jnp.ndarray) -> jnp.ndarray:
        return sin_position_embedding_lookup(
            self._table_terms, token_indices,
            out_dtype=self._out_dtype, tile_tokens=self._tile_tokens)


if __name__ == "__main__":
    num_embeddings = 16
    embedding_dim = 64     # must be even
    batch, seq = 2, 8

    module = SinPositionEmbedding(num_embeddings, embedding_dim)

    key = jax.random.PRNGKey(0)
    # valid indices: 0 (padding row) .. num_embeddings (last real position)
    token_indices = jax.random.randint(
        key, (batch, seq), minval=0, maxval=num_embeddings + 1, dtype=jnp.int32)

    out = jax.block_until_ready(module(token_indices))
    ref = module.position_embedding_matrix[token_indices]
    assert out.shape == (batch, seq, embedding_dim)
    assert out.dtype == jnp.float32
    assert jnp.allclose(out, ref, atol=1e-7, rtol=0.0), \
        float(jnp.max(jnp.abs(out - ref)))

    # Multi-tile + ragged-tail path (n_tokens not a multiple of the tile size).
    module_small_tiles = SinPositionEmbedding(num_embeddings, embedding_dim,
                                              tile_tokens=64)
    ti2 = jax.random.randint(jax.random.PRNGKey(1), (3, 40), 0,
                             num_embeddings + 1, dtype=jnp.int32)
    out2 = jax.block_until_ready(module_small_tiles(ti2))
    ref2 = module_small_tiles.position_embedding_matrix[ti2]
    assert out2.shape == (3, 40, embedding_dim)
    assert jnp.allclose(out2, ref2, atol=1e-7, rtol=0.0), \
        float(jnp.max(jnp.abs(out2 - ref2)))

    # Fast path (single bf16 plane, 1 MXU pass): bf16-rounded table rows.
    module_fast = SinPositionEmbedding(num_embeddings, embedding_dim, exact=False)
    out3 = jax.block_until_ready(module_fast(token_indices))
    assert jnp.allclose(out3, ref, atol=1e-2, rtol=0.0), \
        float(jnp.max(jnp.abs(out3 - ref)))

    print("KERNEL_OK")
</pallas_src>

<mosaic_0001>
module attributes {stable_mosaic.version = 11 : i64} {
  func.func @_embed_tile_kernel(%arg0: i32, %arg1: memref<8x1xi32, #tpu.memory_space<vmem>>, %arg2: memref<3x17x64xbf16, #tpu.memory_space<vmem>>, %arg3: memref<8x64xf32, #tpu.memory_space<vmem>>) attributes {dimension_semantics = [#tpu.dimension_semantics<parallel>], iteration_bounds = array<i64: 2>, scalar_prefetch = 0 : i64, scratch_operands = 0 : i64, tpu.core_type = #tpu.core_type<tc>, window_params = [{transform_indices = @transform_0, window_bounds = array<i64: 8, 1>}, {pipeline_mode = #tpu.pipeline_mode<synchronous>, transform_indices = @transform_1, window_bounds = array<i64: 3, 17, 64>}, {transform_indices = @transform_2, window_bounds = array<i64: 8, 64>}]} {
    %c0 = arith.constant 0 : index
    %c0_0 = arith.constant 0 : index
    %0 = vector.load %arg1[%c0, %c0_0] : memref<8x1xi32, #tpu.memory_space<vmem>>, vector<8x1xi32>
    %c0_i32 = arith.constant 0 : i32
    %c16_i32 = arith.constant 16 : i32
    %1 = vector.broadcast %c0_i32 : i32 to vector<8x1xi32>
    %2 = arith.maxsi %1, %0 : vector<8x1xi32>
    %3 = vector.broadcast %c16_i32 : i32 to vector<8x1xi32>
    %4 = arith.minsi %3, %2 : vector<8x1xi32>
    %5 = tpu.iota {dimensions = array<i32: 1>} : vector<8x17xi32>
    %6 = vector.broadcast %4 : vector<8x1xi32> to vector<8x17xi32>
    %7 = arith.cmpi eq, %6, %5 : vector<8x17xi32>
    %8 = arith.extui %7 : vector<8x17xi1> to vector<8x17xi32>
    %9 = arith.sitofp %8 : vector<8x17xi32> to vector<8x17xf32>
    %10 = arith.truncf %9 : vector<8x17xf32> to vector<8x17xbf16>
    %cst = arith.constant 0.000000e+00 : f32
    %11 = vector.broadcast %cst : f32 to vector<8x64xf32>
    %c0_1 = arith.constant 0 : index
    %c0_2 = arith.constant 0 : index
    %c0_3 = arith.constant 0 : index
    %12 = vector.load %arg2[%c0_1, %c0_2, %c0_3] : memref<3x17x64xbf16, #tpu.memory_space<vmem>>, vector<1x17x64xbf16>
    %13 = vector.shape_cast %12 : vector<1x17x64xbf16> to vector<17x64xbf16>
    %cst_4 = arith.constant dense<0.000000e+00> : vector<8x64xf32>
    %14 = tpu.matmul %10, %13, %cst_4 {dimension_numbers = #tpu.dot_dimension_numbers<[1], [0], [0], [1], [0, 0, 1, 1], [], []>} : vector<8x17xbf16>, vector<17x64xbf16>, vector<8x64xf32> -> vector<8x64xf32>
    %15 = arith.addf %11, %14 : vector<8x64xf32>
    %c1 = arith.constant 1 : index
    %c0_5 = arith.constant 0 : index
    %c0_6 = arith.constant 0 : index
    %16 = vector.load %arg2[%c1, %c0_5, %c0_6] : memref<3x17x64xbf16, #tpu.memory_space<vmem>>, vector<1x17x64xbf16>
    %17 = vector.shape_cast %16 : vector<1x17x64xbf16> to vector<17x64xbf16>
    %cst_7 = arith.constant dense<0.000000e+00> : vector<8x64xf32>
    %18 = tpu.matmul %10, %17, %cst_7 {dimension_numbers = #tpu.dot_dimension_numbers<[1], [0], [0], [1], [0, 0, 1, 1], [], []>} : vector<8x17xbf16>, vector<17x64xbf16>, vector<8x64xf32> -> vector<8x64xf32>
    %19 = arith.addf %15, %18 : vector<8x64xf32>
    %c2 = arith.constant 2 : index
    %c0_8 = arith.constant 0 : index
    %c0_9 = arith.constant 0 : index
    %20 = vector.load %arg2[%c2, %c0_8, %c0_9] : memref<3x17x64xbf16, #tpu.memory_space<vmem>>, vector<1x17x64xbf16>
    %21 = vector.shape_cast %20 : vector<1x17x64xbf16> to vector<17x64xbf16>
    %cst_10 = arith.constant dense<0.000000e+00> : vector<8x64xf32>
    %22 = tpu.matmul %10, %21, %cst_10 {dimension_numbers = #tpu.dot_dimension_numbers<[1], [0], [0], [1], [0, 0, 1, 1], [], []>} : vector<8x17xbf16>, vector<17x64xbf16>, vector<8x64xf32> -> vector<8x64xf32>
    %23 = arith.addf %19, %22 : vector<8x64xf32>
    %c0_11 = arith.constant 0 : index
    %c0_12 = arith.constant 0 : index
    %24 = vector.load %arg3[%c0_11, %c0_12] : memref<8x64xf32, #tpu.memory_space<vmem>>, vector<8x64xf32>
    tpu.vector_store %arg3[%c0_11, %c0_12], %23 {strides = array<i32>} : memref<8x64xf32, #tpu.memory_space<vmem>>, vector<8x64xf32>,
    return
  }
  func.func @transform_0(%arg0: i32) -> (i32, i32) {
    %c0_i32 = arith.constant 0 : i32
    %c0_i32_0 = arith.constant 0 : i32
    return %arg0, %c0_i32 : i32, i32
  }
  func.func @transform_1(%arg0: i32) -> (i32, i32, i32) {
    %c0_i32 = arith.constant 0 : i32
    %c0_i32_0 = arith.constant 0 : i32
    %c0_i32_1 = arith.constant 0 : i32
    %c0_i32_2 = arith.constant 0 : i32
    return %c0_i32, %c0_i32_0, %c0_i32_1 : i32, i32, i32
  }
  func.func @transform_2(%arg0: i32) -> (i32, i32) {
    %c0_i32 = arith.constant 0 : i32
    %c0_i32_0 = arith.constant 0 : i32
    return %arg0, %c0_i32 : i32, i32
  }
}

</mosaic_0001>

<llo_original>
// kernel: tpu_custom_call.1
$region0: #{tpu_custom_call.1}
  #allocation0 [shape = 'u32[]', space=smem, size = 0x4, offset = 0x4, fixed_abs, tag = 'smem constant byte address 0x4 - core index']
  #allocation1 [shape = 'u32[144,128]{1,0:T(1,128)}', space=vmem, size = 0x12000, scoped, tag = 'internal scratch']
  %s0 = inlined_call_operand.vmem [shape: s32[16,1], index: 0, kind: input, shape index: {}]
  %s1 = inlined_call_operand.vmem [shape: bf16[3,17,64], index: 1, kind: input, shape index: {}]
  %s2 = inlined_call_operand.hbm [shape: f32[16,64], index: 2, kind: output, shape index: {}]
  %s3 = sld [smem:[#allocation0]]
  $region41: #{tpu_custom_call.1} parent=0
    _
  %s5 = ssub.s32 1, %s3
  %s6 = scalar_select 0, %s5, %s3
  $region1: #{tpu_custom_call.1} parent=0
    #allocation2 [shape = 'u8[8192]{0}', space=vmem, size = 0x2000, scoped, tag = 'output window, operand 0']
    #allocation3 [shape = 's32[2]{0}', space=sflag, size = 0x8, scoped, tag = 'scoped memory for tpu_custom_call.1']
    %7 = vsyncpa [#allocation3], 0
    %s8 = scalar_lea.sflag [#allocation3], 1
    %9 = vsyncpa %s8, 0
    loop: start=0, step=1, limit=4
    $region2: #{tpu_custom_call.1} parent=1 // loop_pre_header
      _
    $region3: #{tpu_custom_call.1} parent=1 // loop_header
      %s11 = sphi 0, %s15
      %p12 = scmp.ge.s32.totalorder %s11, 4
      %s21 = sphi 0, %s23
      %s24 = sphi 0, %s21
      %s25 = sphi 0, %s24
      %s41 = sphi 0, %s25
      %s45 = sphi 0, %s45
      %s47 = sphi 0, %s45
      %s48 = sphi 0, %s47
      %s62 = sphi 0, %s48
      %s68 = sphi 0, %s70
      %s71 = sphi 0, %s68
      %s72 = sphi 0, %s71
      %s88 = sphi 0, %s72
    $region4: #{tpu_custom_call.1} parent=1 // loop_header_branch
      %14 = sbr.rel (%p12) target = $region8
    $region5: #{tpu_custom_call.1} parent=1 // loop_body
      %s16 = ssub.s32 %s11, 1
      %s17 = ssub.s32 %s11, 2
      %s18 = sadd.s32 %s11, 1
      %s19 = ssub.s32 %s11, %s18
      %p20 = scmp.eq.s32.totalorder %s19, 0
      %s22 = sadd.s32 %s21, 1
      %s23 = scalar_select %p20, %s21, %s22
      %p26 = pneg %p20
      %p27 = scmp.eq.s32.totalorder %s11, 1
      %p28 = por %p26, %p27
      %p29 = scmp.ne.s32.totalorder %s21, %s24
      %p30 = scmp.eq.s32.totalorder %s11, 0
      %p31 = por %p29, %p30
      %p32 = scmp.ne.s32.totalorder %s21, %s24
      %p33 = scmp.eq.s32.totalorder %s16, 1
      %p34 = por %p32, %p33
      %p35 = scmp.ne.s32.totalorder %s24, %s25
      %p36 = scmp.eq.s32.totalorder %s16, 0
      %p37 = por %p35, %p36
      %p38 = scmp.ne.s32.totalorder %s24, %s25
      %p39 = scmp.eq.s32.totalorder %s17, 1
      %p40 = por %p38, %p39
      %p42 = scmp.ne.s32.totalorder %s25, %s41
      %p43 = scmp.eq.s32.totalorder %s17, 0
      %p44 = por %p42, %p43
      %s46 = sadd.s32 %s45, 1
      %p49 = scmp.eq.s32.totalorder %s11, 1
      %p50 = scmp.ne.s32.totalorder %s45, %s47
      %p51 = scmp.eq.s32.totalorder %s11, 0
      %p52 = por %p50, %p51
      %p53 = scmp.ne.s32.totalorder %s45, %s47
      %p54 = scmp.eq.s32.totalorder %s16, 1
      %p55 = por %p53, %p54
      %p56 = scmp.ne.s32.totalorder %s47, %s48
      %p57 = scmp.eq.s32.totalorder %s16, 0
      %p58 = por %p56, %p57
      %p59 = scmp.ne.s32.totalorder %s47, %s48
      %p60 = scmp.eq.s32.totalorder %s17, 1
      %p61 = por %p59, %p60
      %p63 = scmp.ne.s32.totalorder %s48, %s62
      %p64 = scmp.eq.s32.totalorder %s17, 0
      %p65 = por %p63, %p64
      %s66 = ssub.s32 %s11, %s18
      %p67 = scmp.eq.s32.totalorder %s66, 0
      %s69 = sadd.s32 %s68, 1
      %s70 = scalar_select %p67, %s68, %s69
      %p73 = pneg %p67
      %p74 = scmp.eq.s32.totalorder %s11, 1
      %p75 = por %p73, %p74
      %p76 = scmp.ne.s32.totalorder %s68, %s71
      %p77 = scmp.eq.s32.totalorder %s11, 0
      %p78 = por %p76, %p77
      %p79 = scmp.ne.s32.totalorder %s68, %s71
      %p80 = scmp.eq.s32.totalorder %s16, 1
      %p81 = por %p79, %p80
      %p82 = scmp.ne.s32.totalorder %s71, %s72
      %p83 = scmp.eq.s32.totalorder %s16, 0
      %p84 = por %p82, %p83
      %p85 = scmp.ne.s32.totalorder %s71, %s72
      %p86 = scmp.eq.s32.totalorder %s17, 1
      %p87 = por %p85, %p86
      %p89 = scmp.ne.s32.totalorder %s72, %s88
      %p90 = scmp.eq.s32.totalorder %s17, 0
      %p91 = por %p89, %p90
      %p92 = scmp.le.s32.totalorder 1, %s11
      %p93 = scmp.lt.s32.totalorder %s11, 3
      %p94 = pnand %p92, %p93
      %p95 = pneg %p94
      // Predicated region
      $region9: #{tpu_custom_call.1} parent=5 // pred_check
        _
      $region10: #{tpu_custom_call.1} parent=5 // pred_check_branch
        %97 = sbr.rel (%p94) target = $region12
      $region11: #{tpu_custom_call.1} parent=5 // pred_region
        %s98 = ssub.s32 %s11, 1
        // Predicated region
        $region13: #{tpu_custom_call.1} parent=11 // pred_check
          %p99 = pneg %p58
        $region14: #{tpu_custom_call.1} parent=11 // pred_check_branch
          %101 = sbr.rel (%p99) target = $region16
        $region15: #{tpu_custom_call.1} parent=11 // pred_region
          _
        $region16: #{tpu_custom_call.1} parent=11 // pred_fallthru
          _
      $region12: #{tpu_custom_call.1} parent=5 // pred_fallthru
        _
      %p102 = scmp.lt.s32.totalorder %s11, 2
      // Predicated region
      $region17: #{tpu_custom_call.1} parent=5 // pred_check
        %p103 = pneg %p102
      $region18: #{tpu_custom_call.1} parent=5 // pred_check_branch
        %105 = sbr.rel (%p103) target = $region20
      $region19: #{tpu_custom_call.1} parent=5 // pred_region
        // Predicated region
        $region21: #{tpu_custom_call.1} parent=19 // pred_check
          %p106 = pneg %p31
        $region22: #{tpu_custom_call.1} parent=19 // pred_check_branch
          %108 = sbr.rel (%p106) target = $region24
        $region23: #{tpu_custom_call.1} parent=19 // pred_region
          %p109 = scmp.lt.s32.totalorder %s11, 1
          %s110 = scalar_select %p109, %s11, 1
          %s111 = smul.addr %s110, 8
          %s112 = scalar_lea.vmem %s0, %s111
        $region24: #{tpu_custom_call.1} parent=19 // pred_fallthru
          _
      $region20: #{tpu_custom_call.1} parent=5 // pred_fallthru
        _
      %p113 = scmp.le.s32.totalorder 1, %s11
      %p114 = scmp.lt.s32.totalorder %s11, 3
      %p115 = pnand %p113, %p114
      %p116 = pneg %p115
      // Predicated region
      $region25: #{tpu_custom_call.1} parent=5 // pred_check
        _
      $region26: #{tpu_custom_call.1} parent=5 // pred_check_branch
        %118 = sbr.rel (%p115) target = $region28
      $region27: #{tpu_custom_call.1} parent=5 // pred_region
        %s119 = ssub.s32 %s11, 1
        %p120 = scmp.lt.s32.totalorder %s16, 1
        %s121 = scalar_select %p120, %s16, 1
        %s122 = smul.addr %s121, 8
        %s123 = scalar_lea.vmem %s0, %s122
        %p124 = pneg %p37
        %p125 = pneg %p34
        %p126 = pneg %p58
        %p127 = pneg %p55
        %p128 = pneg %p84
        %p129 = pneg %p81
        %s130 = sand.u32 %s71, 1
        %s131 = scalar_lea.sflag [#allocation3], %s130
        %s132 = sand.u32 %s71, 1
        %s133 = smul.addr %s132, 8
        %s134 = scalar_lea.vmem [#allocation2], %s133
        %p135 = scmp.lt.s32.totalorder %s16, 1
        %s136 = scalar_select %p135, %s16, 1
        %s137 = smul.addr %s136, 8
        %s138 = scalar_lea.vmem %s0, %s137
        %v140 = vld [vmem:[%s138] sm:$0xff]
        %vm141 = vcmp.gt.s32.totalorder %v140, 0
        %v142 = vsel %vm141, %v140, 0
        %vm143 = vcmp.lt.s32.totalorder %v142, 16
        %v144 = vsel %vm143, %v142, 16
        %v145 = vlaneseq
        %v146 = vand.u32 %v145, 127
        %147 = vset.pattern.permute.xlu0 0
        %148 = vperm.xlu0 %147, %v144
        %v149 = vpop.permute.xlu0 %148
        %vm150 = vcmp.eq.s32.totalorder %v149, %v146
        %v151 = vsel %vm150, 1, 0
        %v152 = vcvt.s32.f32 %v151
        %v153 = vpack.c.bf16 %v152, %v152
        %v154 = vld [vmem:[%s1] sm:$0xf]
        %v155 = vld [vmem:[%s1 + $0x4] sm:$0xf]
        %v156 = vld [vmem:[%s1 + $0x8] sm:$0x1]
        %s157 = scalar_lea.vmem %s1, 12
        %v158 = vld [vmem:[%s157] sm:$0xf]
        %v159 = vld [vmem:[%s157 + $0x4] sm:$0xf]
        %v160 = vld [vmem:[%s157 + $0x8] sm:$0x1]
        %v164 = vunpack.c.l.b16 %v158
        %v165 = vunpack.c.l.b16 %v159
        %v166 = vunpack.c.l.b16 %v160
        %v167 = vpack.c.b16 %v165, %v164
        %v168 = vpack.c.b16 %v166, %v166
        %vm170 = vcmask 138240
        %v172 = vsel %vm170, %v153, 0
        %vm174 = vcmask 1040384
        %v175 = vsel 0, 4294967295, 65535
        %v176 = vsel %vm174, %v175, 0
        %v178 = vand.u32 %v168, %v176
        %180 = vmatprep.subr.bf16.mxu0 0
        %181 = vmatpush1.bf16.msra.mxu0 %v167
        %182 = vmatprep.subr.bf16.mxu0 0
        %183 = vmatpush1.bf16.msra.mxu0 %v178
        %184 = vmatprep.subr.bf16.mxu0 0
        %185 = vmatpush1.bf16.msra.mxu0 0
        %186 = vmatprep.subr.bf16.mxu0 0
        %187 = vmatpush1.bf16.msra.mxu0 0
        %188 = vmatprep.subr.bf16.mxu0 0
        %189 = vmatpush1.bf16.msra.mxu0 0
        %190 = vmatprep.subr.bf16.mxu0 0
        %191 = vmatpush1.bf16.msra.mxu0 0
        %192 = vmatprep.subr.bf16.mxu0 0
        %193 = vmatpush1.bf16.msra.mxu0 0
        %194 = vmatprep.subr.bf16.mxu0 0
        %195 = vmatpush1.bf16.msra.mxu0 0
        %196 = vmatprep.subr.bf16.mxu0 0
        %197 = vmatpush1.bf16.msra.mxu0 0
        %198 = vmatprep.subr.bf16.mxu0 0
        %199 = vmatpush1.bf16.msra.mxu0 0
        %200 = vmatprep.subr.bf16.mxu0 0
        %201 = vmatpush1.bf16.msra.mxu0 0
        %202 = vmatprep.subr.bf16.mxu0 0
        %203 = vmatpush1.bf16.msra.mxu0 0
        %204 = vmatprep.subr.bf16.mxu0 0
        %205 = vmatpush1.bf16.msra.mxu0 0
        %206 = vmatprep.subr.bf16.mxu0 0
        %207 = vmatpush1.bf16.msra.mxu0 0
        %208 = vmatprep.subr.bf16.mxu0 0
        %209 = vmatpush1.bf16.msra.mxu0 0
        %210 = vmatprep.subr.bf16.mxu0 0
        %211 = vmatpush1.bf16.msra.mxu0 0
        %212 = vmatprep.mubr.bf16.mxu0 0
        %213 = vmatmul.mubr.bf16.gmra.mrb[0].mxu0 %v172
        %v214 = vpop.f32.mrb[0].mxu0
        %v215 = vadd.f32 0.0, %v214
        %v216 = vpop.f32.mrb[0].mxu0
        %v217 = vpop.f32.mrb[0].mxu0
        %v218 = vpop.f32.mrb[0].mxu0
        %219 = vdwg.mxu0
        %v223 = vunpack.c.l.b16 %v154
        %v224 = vunpack.c.l.b16 %v155
        %v225 = vunpack.c.l.b16 %v156
        %v226 = vpack.c.b16 %v224, %v223
        %v227 = vpack.c.b16 %v225, %v225
        %v230 = vand.u32 %v227, %v176
        %232 = vmatprep.subr.bf16.mxu0 0
        %233 = vmatpush1.bf16.msra.mxu0 %v226
        %234 = vmatprep.subr.bf16.mxu0 0
        %235 = vmatpush1.bf16.msra.mxu0 %v230
        %236 = vmatprep.subr.bf16.mxu0 0
        %237 = vmatpush1.bf16.msra.mxu0 0
        %238 = vmatprep.subr.bf16.mxu0 0
        %239 = vmatpush1.bf16.msra.mxu0 0
        %240 = vmatprep.subr.bf16.mxu0 0
        %241 = vmatpush1.bf16.msra.mxu0 0
        %242 = vmatprep.subr.bf16.mxu0 0
        %243 = vmatpush1.bf16.msra.mxu0 0
        %244 = vmatprep.subr.bf16.mxu0 0
        %245 = vmatpush1.bf16.msra.mxu0 0
        %246 = vmatprep.subr.bf16.mxu0 0
        %247 = vmatpush1.bf16.msra.mxu0 0
        %248 = vmatprep.subr.bf16.mxu0 0
        %249 = vmatpush1.bf16.msra.mxu0 0
        %250 = vmatprep.subr.bf16.mxu0 0
        %251 = vmatpush1.bf16.msra.mxu0 0
        %252 = vmatprep.subr.bf16.mxu0 0
        %253 = vmatpush1.bf16.msra.mxu0 0
        %254 = vmatprep.subr.bf16.mxu0 0
        %255 = vmatpush1.bf16.msra.mxu0 0
        %256 = vmatprep.subr.bf16.mxu0 0
        %257 = vmatpush1.bf16.msra.mxu0 0
        %258 = vmatprep.subr.bf16.mxu0 0
        %259 = vmatpush1.bf16.msra.mxu0 0
        %260 = vmatprep.subr.bf16.mxu0 0
        %261 = vmatpush1.bf16.msra.mxu0 0
        %262 = vmatprep.subr.bf16.mxu0 0
        %263 = vmatpush1.bf16.msra.mxu0 0
        %264 = vmatprep.mubr.bf16.mxu0 0
        %265 = vmatmul.mubr.bf16.gmra.mrb[0].mxu0 %v172
        %v266 = vpop.f32.mrb[0].mxu0
        %v267 = vadd.f32 %v215, %v266
        %v268 = vpop.f32.mrb[0].mxu0
        %v269 = vpop.f32.mrb[0].mxu0
        %v270 = vpop.f32.mrb[0].mxu0
        %271 = vdwg.mxu0
        %s272 = scalar_lea.vmem %s1, 24
        %v273 = vld [vmem:[%s272] sm:$0xf]
        %v274 = vld [vmem:[%s272 + $0x4] sm:$0xf]
        %v275 = vld [vmem:[%s272 + $0x8] sm:$0x1]
        %v279 = vunpack.c.l.b16 %v273
        %v280 = vunpack.c.l.b16 %v274
        %v281 = vunpack.c.l.b16 %v275
        %v282 = vpack.c.b16 %v280, %v279
        %v283 = vpack.c.b16 %v281, %v281
        %v286 = vand.u32 %v283, %v176
        %288 = vmatprep.subr.bf16.mxu0 0
        %289 = vmatpush1.bf16.msra.mxu0 %v282
        %290 = vmatprep.subr.bf16.mxu0 0
        %291 = vmatpush1.bf16.msra.mxu0 %v286
        %292 = vmatprep.subr.bf16.mxu0 0
        %293 = vmatpush1.bf16.msra.mxu0 0
        %294 = vmatprep.subr.bf16.mxu0 0
        %295 = vmatpush1.bf16.msra.mxu0 0
        %296 = vmatprep.subr.bf16.mxu0 0
        %297 = vmatpush1.bf16.msra.mxu0 0
        %298 = vmatprep.subr.bf16.mxu0 0
        %299 = vmatpush1.bf16.msra.mxu0 0
        %300 = vmatprep.subr.bf16.mxu0 0
        %301 = vmatpush1.bf16.msra.mxu0 0
        %302 = vmatprep.subr.bf16.mxu0 0
        %303 = vmatpush1.bf16.msra.mxu0 0
        %304 = vmatprep.subr.bf16.mxu0 0
        %305 = vmatpush1.bf16.msra.mxu0 0
        %306 = vmatprep.subr.bf16.mxu0 0
        %307 = vmatpush1.bf16.msra.mxu0 0
        %308 = vmatprep.subr.bf16.mxu0 0
        %309 = vmatpush1.bf16.msra.mxu0 0
        %310 = vmatprep.subr.bf16.mxu0 0
        %311 = vmatpush1.bf16.msra.mxu0 0
        %312 = vmatprep.subr.bf16.mxu0 0
        %313 = vmatpush1.bf16.msra.mxu0 0
        %314 = vmatprep.subr.bf16.mxu0 0
        %315 = vmatpush1.bf16.msra.mxu0 0
        %316 = vmatprep.subr.bf16.mxu0 0
        %317 = vmatpush1.bf16.msra.mxu0 0
        %318 = vmatprep.subr.bf16.mxu0 0
        %319 = vmatpush1.bf16.msra.mxu0 0
        %320 = vmatprep.mubr.bf16.mxu0 0
        %321 = vmatmul.mubr.bf16.gmra.mrb[0].mxu0 %v172
        %v322 = vpop.f32.mrb[0].mxu0
        %v323 = vadd.f32 0.0, %v322
        %v324 = vpop.f32.mrb[0].mxu0
        %v325 = vpop.f32.mrb[0].mxu0
        %v326 = vpop.f32.mrb[0].mxu0
        %327 = vdwg.mxu0
        %v328 = vadd.f32 %v267, %v323
        %vm329 = vcmask 523264
        %330 = vst.msk [vmem:[%s134] sm:$0xff] %vm329, %v328
        %s331 = sand.u32 %s71, 1
        %s332 = scalar_lea.sflag [#allocation3], %s331
        %s333 = sand.u32 %s71, 1
        %s334 = smul.addr %s333, 8
        %s335 = scalar_lea.vmem [#allocation2], %s334
        // Predicated region
        $region29: #{tpu_custom_call.1} parent=27 // pred_check
          %p336 = pneg %p81
        $region30: #{tpu_custom_call.1} parent=27 // pred_check_branch
          %338 = sbr.rel (%p336) target = $region32
        $region31: #{tpu_custom_call.1} parent=27 // pred_region
          %s340 = ssub.s32 128, 128
          %341 = vsyncadd %s332, %s340
          %s342 = smul.addr %s16, 128
          %s343 = scalar_lea.hbm %s2, %s342
          %s345 = sshll.u32 %s335, 4
          %s346 = int_to_ptr.vmem [resolvable:$true] %s345
          %348 = dma.vmem_to_hbm [thread:$0]  %s346, 128, %s343, %s332
        $region32: #{tpu_custom_call.1} parent=27 // pred_fallthru
          _
      $region28: #{tpu_custom_call.1} parent=5 // pred_fallthru
        _
      %p349 = scmp.le.s32.totalorder 2, %s11
      // Predicated region
      $region33: #{tpu_custom_call.1} parent=5 // pred_check
        %p350 = pneg %p349
      $region34: #{tpu_custom_call.1} parent=5 // pred_check_branch
        %352 = sbr.rel (%p350) target = $region36
      $region35: #{tpu_custom_call.1} parent=5 // pred_region
        %s353 = ssub.s32 %s11, 2
        // Predicated region
        $region37: #{tpu_custom_call.1} parent=35 // pred_check
          %p354 = pneg %p87
        $region38: #{tpu_custom_call.1} parent=35 // pred_check_branch
          %356 = sbr.rel (%p354) target = $region40
        $region39: #{tpu_custom_call.1} parent=35 // pred_region
          %s357 = sand.u32 %s72, 1
          %s358 = scalar_lea.sflag [#allocation3], %s357
          %s359 = sand.u32 %s72, 1
          %s360 = smul.addr %s359, 8
          %s361 = scalar_lea.vmem [#allocation2], %s360
          %362 = dma.done %s358, 128
        $region40: #{tpu_custom_call.1} parent=35 // pred_fallthru
          _
      $region36: #{tpu_custom_call.1} parent=5 // pred_fallthru
        _
    $region6: #{tpu_custom_call.1} parent=1 // loop_footer
      %s15 = sadd.s32 1, %s11
    $region7: #{tpu_custom_call.1} parent=1 // loop_footer_branch
      %10 = sbr.rel target = $region3
    $region8: #{tpu_custom_call.1} parent=1 // loop_exit
      _
    %363 = vsyncpa [#allocation3], 1
    %s364 = scalar_lea.sflag [#allocation3], 1
    %365 = vsyncpa %s364, 1

</llo_original>
